<compile_context>
chip_gen: v5e
topology: v5e:2x2
jax: 0.10.0
libtpu: 0.0.40
codegen_flags: <defaults>
</compile_context>

<pallas_src>
import functools

import jax
import jax.numpy as jnp
from jax.experimental import pallas as pl
from jax.experimental.pallas import tpu as pltpu

_LANE = 1024           # lane-dense last dim: large multiple of 128
_MAX_BLOCK_ROWS = 512  # 512 x 1024 x 4 B = 2 MiB f32 per block


def _prng_noise_kernel(seed_ref, x_ref, o_ref, *, mean, std):
    # Hardware-PRNG path (real TPU only).  Mixing program_id into prng_seed
    # gives each block an independent stream (not just consecutive seeds).
    pltpu.prng_seed(seed_ref[0], pl.program_id(0))
    # NOTE(v7x): if the single EUP (Box-Muller transcendentals) ever becomes
    # the bottleneck after the tiling fix, switch to prng_random_bits + a
    # VPU-only transform.  v5e/v6e stay HBM-bound here.
    noise = pltpu.stateful_normal(x_ref.shape, jnp.float32)
    scaled = noise * jnp.float32(std) + jnp.float32(mean)
    # Cast the noise once; add in the input's native dtype.
    o_ref[...] = x_ref[...] + scaled.astype(o_ref.dtype)


def _add_noise_kernel(x_ref, n_ref, o_ref, *, mean, std):
    # Portable path: N(0,1) noise generated outside the kernel, fused
    # scale + shift + add inside.
    scaled = n_ref[...] * jnp.float32(std) + jnp.float32(mean)
    o_ref[...] = x_ref[...] + scaled.astype(o_ref.dtype)


def _padded_2d_layout(total):
    """Lane-dense (rows, _LANE) layout with rows a multiple of the block rows."""
    rows = max(8, -(-total // _LANE))          # ceil-div, at least 8 sublanes
    rows = ((rows + 7) // 8) * 8               # sublane multiple of 8
    block_rows = min(rows, _MAX_BLOCK_ROWS)
    rows = ((rows + block_rows - 1) // block_rows) * block_rows
    return rows, block_rows


def gaussian_noisy(x, *, mean, std, seed=0):
    """out = x + N(0, 1) * std + mean   (kornia RandomGaussianNoise, p=1.0)."""
    orig_shape = x.shape
    total = x.size
    rows, block_rows = _padded_2d_layout(total)
    padded = rows * _LANE

    x_flat = x.reshape(-1)
    if padded != total:
        x_flat = jnp.pad(x_flat, (0, padded - total))
    x2 = x_flat.reshape(rows, _LANE)

    grid = (rows // block_rows,)
    block = (block_rows, _LANE)
    cparams = pltpu.CompilerParams(dimension_semantics=("parallel",))

    if jax.default_backend() == "tpu":
        seed_arr = jnp.asarray([seed], dtype=jnp.int32)
        out2 = pl.pallas_call(
            functools.partial(_prng_noise_kernel, mean=mean, std=std),
            out_shape=jax.ShapeDtypeStruct((rows, _LANE), x.dtype),
            grid_spec=pltpu.PrefetchScalarGridSpec(
                num_scalar_prefetch=1,                       # seed -> SMEM
                grid=grid,
                in_specs=[pl.BlockSpec(block, lambda i, s: (i, 0))],
                out_specs=pl.BlockSpec(block, lambda i, s: (i, 0)),
            ),
            compiler_params=cparams,
            input_output_aliases={1: 0},   # output may overwrite padded x slab
        )(seed_arr, x2)
    else:
        # Non-TPU / interpret fallback: hardware PRNG primitives do not lower
        # here, so draw the noise with jax.random and fuse the affine add.
        noise2 = jax.random.normal(
            jax.random.PRNGKey(seed), (rows, _LANE), dtype=jnp.float32)
        out2 = pl.pallas_call(
            functools.partial(_add_noise_kernel, mean=mean, std=std),
            out_shape=jax.ShapeDtypeStruct((rows, _LANE), x.dtype),
            grid=grid,
            in_specs=[pl.BlockSpec(block, lambda i: (i, 0)),
                      pl.BlockSpec(block, lambda i: (i, 0))],
            out_specs=pl.BlockSpec(block, lambda i: (i, 0)),
            compiler_params=cparams,
        )(x2, noise2)

    return out2.reshape(-1)[:total].reshape(orig_shape)


if __name__ == "__main__":
    key = jax.random.PRNGKey(0)
    x = jax.random.normal(key, (2, 4, 16, 16), dtype=jnp.float32)

    mean, std = 0.1, 0.5
    y = jax.block_until_ready(gaussian_noisy(x, mean=mean, std=std, seed=1234))

    # Sanity checks: shape/dtype preserved, noise statistics roughly match.
    assert y.shape == x.shape and y.dtype == x.dtype
    diff = (y - x).reshape(-1)
    emp_mean = float(jnp.mean(diff))
    emp_std = float(jnp.std(diff))
    assert abs(emp_mean - mean) < 0.1, f"noise mean off: {emp_mean}"
    assert abs(emp_std - std) < 0.15, f"noise std off: {emp_std}"

    print("KERNEL_OK")
</pallas_src>

<mosaic_0001>
module attributes {stable_mosaic.version = 11 : i64} {
  func.func @_add_noise_kernel(%arg0: i32, %arg1: memref<8x1024xf32, #tpu.memory_space<vmem>>, %arg2: memref<8x1024xf32, #tpu.memory_space<vmem>>, %arg3: memref<8x1024xf32, #tpu.memory_space<vmem>>) attributes {dimension_semantics = [#tpu.dimension_semantics<parallel>], iteration_bounds = array<i64: 1>, scalar_prefetch = 0 : i64, scratch_operands = 0 : i64, tpu.core_type = #tpu.core_type<tc>, window_params = [{transform_indices = @transform_0, window_bounds = array<i64: 8, 1024>}, {transform_indices = @transform_1, window_bounds = array<i64: 8, 1024>}, {transform_indices = @transform_2, window_bounds = array<i64: 8, 1024>}]} {
    %c0 = arith.constant 0 : index
    %c0_0 = arith.constant 0 : index
    %0 = vector.load %arg2[%c0, %c0_0] : memref<8x1024xf32, #tpu.memory_space<vmem>>, vector<8x1024xf32>
    %cst = arith.constant 5.000000e-01 : f32
    %1 = vector.broadcast %cst : f32 to vector<8x1024xf32>
    %2 = arith.mulf %0, %1 : vector<8x1024xf32>
    %cst_1 = arith.constant 1.000000e-01 : f32
    %3 = vector.broadcast %cst_1 : f32 to vector<8x1024xf32>
    %4 = arith.addf %2, %3 : vector<8x1024xf32>
    %c0_2 = arith.constant 0 : index
    %c0_3 = arith.constant 0 : index
    %5 = vector.load %arg1[%c0_2, %c0_3] : memref<8x1024xf32, #tpu.memory_space<vmem>>, vector<8x1024xf32>
    %6 = arith.addf %5, %4 : vector<8x1024xf32>
    %c0_4 = arith.constant 0 : index
    %c0_5 = arith.constant 0 : index
    %7 = vector.load %arg3[%c0_4, %c0_5] : memref<8x1024xf32, #tpu.memory_space<vmem>>, vector<8x1024xf32>
    tpu.vector_store %arg3[%c0_4, %c0_5], %6 {strides = array<i32>} : memref<8x1024xf32, #tpu.memory_space<vmem>>, vector<8x1024xf32>,
    return
  }
  func.func @transform_0(%arg0: i32) -> (i32, i32) {
    %c0_i32 = arith.constant 0 : i32
    %c0_i32_0 = arith.constant 0 : i32
    return %arg0, %c0_i32 : i32, i32
  }
  func.func @transform_1(%arg0: i32) -> (i32, i32) {
    %c0_i32 = arith.constant 0 : i32
    %c0_i32_0 = arith.constant 0 : i32
    return %arg0, %c0_i32 : i32, i32
  }
  func.func @transform_2(%arg0: i32) -> (i32, i32) {
    %c0_i32 = arith.constant 0 : i32
    %c0_i32_0 = arith.constant 0 : i32
    return %arg0, %c0_i32 : i32, i32
  }
}

</mosaic_0001>

<llo_original>
// kernel: tpu_custom_call.1
$region0: #{tpu_custom_call.1}
  #allocation0 [shape = 'u32[]', space=smem, size = 0x4, offset = 0x4, fixed_abs, tag = 'smem constant byte address 0x4 - core index']
  #allocation1 [shape = 'u32[72,128]{1,0:T(1,128)}', space=vmem, size = 0x9000, scoped, tag = 'internal scratch']
  %s0 = inlined_call_operand.hbm [shape: f32[8,1024], index: 0, kind: input, shape index: {}]
  %s1 = inlined_call_operand.hbm [shape: f32[8,1024], index: 1, kind: input, shape index: {}]
  %s2 = inlined_call_operand.hbm [shape: f32[8,1024], index: 2, kind: output, shape index: {}]
  %s3 = sld [smem:[#allocation0]]
  $region26: #{tpu_custom_call.1} parent=0
    _
  %s5 = ssub.s32 1, %s3
  %s6 = scalar_select 0, %s5, %s3
  $region1: #{tpu_custom_call.1} parent=0
    #allocation2 [shape = 'u8[32768]{0}', space=vmem, size = 0x8000, scoped, tag = 'input window, operand 0, single buffered']
    #allocation3 [shape = 's32[1]{0}', space=sflag, size = 0x4, scoped, tag = 'scoped memory for tpu_custom_call.1']
    #allocation4 [shape = 's32[1]{0}', space=sflag, size = 0x4, scoped, tag = 'scoped memory for tpu_custom_call.1']
    #allocation5 [shape = 'u8[32768]{0}', space=vmem, size = 0x8000, scoped, tag = 'input window, operand 1, single buffered']
    #allocation6 [shape = 's32[1]{0}', space=sflag, size = 0x4, scoped, tag = 'scoped memory for tpu_custom_call.1']
    #allocation7 [shape = 'u8[32768]{0}', space=vmem, size = 0x8000, scoped, tag = 'output window, operand 0, single buffered']
    %7 = vsyncpa [#allocation3], 0
    %8 = vsyncpa [#allocation6], 0
    %9 = vsyncpa [#allocation4], 0
    // Predicated region
    $region2: #{tpu_custom_call.1} parent=1 // pred_check
      _
    $region3: #{tpu_custom_call.1} parent=1 // pred_check_branch
      %11 = sbr.rel (0) target = $region5
    $region4: #{tpu_custom_call.1} parent=1 // pred_region
      %13 = vsyncadd [#allocation3], 0
      %s15 = sshll.u32 %s0, 4
      %s16 = int_to_ptr.hbm [resolvable:$true] %s15
      %s17 = sshll.u32 [#allocation2], 4
      %s18 = int_to_ptr.vmem [resolvable:$true] %s17
      %20 = dma.hbm_to_vmem [thread:$0]  %s16, 1024, %s18, [#allocation3]
    $region5: #{tpu_custom_call.1} parent=1 // pred_fallthru
      _
    // Predicated region
    $region6: #{tpu_custom_call.1} parent=1 // pred_check
      _
    $region7: #{tpu_custom_call.1} parent=1 // pred_check_branch
      %22 = sbr.rel (0) target = $region9
    $region8: #{tpu_custom_call.1} parent=1 // pred_region
      %24 = vsyncadd [#allocation6], 0
      %s26 = sshll.u32 %s1, 4
      %s27 = int_to_ptr.hbm [resolvable:$true] %s26
      %s28 = sshll.u32 [#allocation5], 4
      %s29 = int_to_ptr.vmem [resolvable:$true] %s28
      %31 = dma.hbm_to_vmem [thread:$0]  %s27, 1024, %s29, [#allocation6]
    $region9: #{tpu_custom_call.1} parent=1 // pred_fallthru
      _
    // Predicated region
    $region10: #{tpu_custom_call.1} parent=1 // pred_check
      _
    $region11: #{tpu_custom_call.1} parent=1 // pred_check_branch
      %33 = sbr.rel (0) target = $region13
    $region12: #{tpu_custom_call.1} parent=1 // pred_region
      %35 = dma.done [#allocation3], 1024
    $region13: #{tpu_custom_call.1} parent=1 // pred_fallthru
      _
    // Predicated region
    $region14: #{tpu_custom_call.1} parent=1 // pred_check
      _
    $region15: #{tpu_custom_call.1} parent=1 // pred_check_branch
      %37 = sbr.rel (0) target = $region17
    $region16: #{tpu_custom_call.1} parent=1 // pred_region
      %39 = dma.done [#allocation6], 1024
    $region17: #{tpu_custom_call.1} parent=1 // pred_fallthru
      _
    %v40 = vld [vmem:[#allocation5] sm:$0xff]
    %v41 = vld [vmem:[#allocation5 + $0x8] sm:$0xff]
    %v42 = vld [vmem:[#allocation5 + $0x10] sm:$0xff]
    %v43 = vld [vmem:[#allocation5 + $0x18] sm:$0xff]
    %v44 = vld [vmem:[#allocation5 + $0x20] sm:$0xff]
    %v45 = vld [vmem:[#allocation5 + $0x28] sm:$0xff]
    %v46 = vld [vmem:[#allocation5 + $0x30] sm:$0xff]
    %v47 = vld [vmem:[#allocation5 + $0x38] sm:$0xff]
    %v48 = vmul.f32 %v40, 0.5
    %v49 = vmul.f32 %v41, 0.5
    %v50 = vmul.f32 %v42, 0.5
    %v51 = vmul.f32 %v43, 0.5
    %v52 = vmul.f32 %v44, 0.5
    %v53 = vmul.f32 %v45, 0.5
    %v54 = vmul.f32 %v46, 0.5
    %v55 = vmul.f32 %v47, 0.5
    %v56 = vadd.f32 %v48, 0.1
    %v57 = vadd.f32 %v49, 0.1
    %v58 = vadd.f32 %v50, 0.1
    %v59 = vadd.f32 %v51, 0.1
    %v60 = vadd.f32 %v52, 0.1
    %v61 = vadd.f32 %v53, 0.1
    %v62 = vadd.f32 %v54, 0.1
    %v63 = vadd.f32 %v55, 0.1
    %v64 = vld [vmem:[#allocation2] sm:$0xff]
    %v65 = vld [vmem:[#allocation2 + $0x8] sm:$0xff]
    %v66 = vld [vmem:[#allocation2 + $0x10] sm:$0xff]
    %v67 = vld [vmem:[#allocation2 + $0x18] sm:$0xff]
    %v68 = vld [vmem:[#allocation2 + $0x20] sm:$0xff]
    %v69 = vld [vmem:[#allocation2 + $0x28] sm:$0xff]
    %v70 = vld [vmem:[#allocation2 + $0x30] sm:$0xff]
    %v71 = vld [vmem:[#allocation2 + $0x38] sm:$0xff]
    %v72 = vadd.f32 %v64, %v56
    %v73 = vadd.f32 %v65, %v57
    %v74 = vadd.f32 %v66, %v58
    %v75 = vadd.f32 %v67, %v59
    %v76 = vadd.f32 %v68, %v60
    %v77 = vadd.f32 %v69, %v61
    %v78 = vadd.f32 %v70, %v62
    %v79 = vadd.f32 %v71, %v63
    %80 = vst [vmem:[#allocation7] sm:$0xff] %v72
    %81 = vst [vmem:[#allocation7 + $0x8] sm:$0xff] %v73
    %82 = vst [vmem:[#allocation7 + $0x10] sm:$0xff] %v74
    %83 = vst [vmem:[#allocation7 + $0x18] sm:$0xff] %v75
    %84 = vst [vmem:[#allocation7 + $0x20] sm:$0xff] %v76
    %85 = vst [vmem:[#allocation7 + $0x28] sm:$0xff] %v77
    %86 = vst [vmem:[#allocation7 + $0x30] sm:$0xff] %v78
    %87 = vst [vmem:[#allocation7 + $0x38] sm:$0xff] %v79
    // Predicated region
    $region18: #{tpu_custom_call.1} parent=1 // pred_check
      _
    $region19: #{tpu_custom_call.1} parent=1 // pred_check_branch
      %89 = sbr.rel (0) target = $region21
    $region20: #{tpu_custom_call.1} parent=1 // pred_region
      %91 = vsyncadd [#allocation4], 0
      %s93 = sshll.u32 [#allocation7], 4
      %s94 = int_to_ptr.vmem [resolvable:$true] %s93
      %s95 = sshll.u32 %s2, 4
      %s96 = int_to_ptr.hbm [resolvable:$true] %s95
      %98 = dma.vmem_to_hbm [thread:$0]  %s94, 1024, %s96, [#allocation4]
    $region21: #{tpu_custom_call.1} parent=1 // pred_fallthru
      _
    // Predicated region
    $region22: #{tpu_custom_call.1} parent=1 // pred_check
      _
    $region23: #{tpu_custom_call.1} parent=1 // pred_check_branch
      %100 = sbr.rel (0) target = $region25
    $region24: #{tpu_custom_call.1} parent=1 // pred_region
      %102 = dma.done [#allocation4], 1024
    $region25: #{tpu_custom_call.1} parent=1 // pred_fallthru
      _
    %103 = vsyncpa [#allocation3], 1
    %104 = vsyncpa [#allocation6], 1
    %105 = vsyncpa [#allocation4], 1

</llo_original>
